<compile_context>
chip_gen: v7x
topology: tpu7x:2x2x1
jax: 0.10.0
libtpu: 0.0.40
codegen_flags: <defaults>
</compile_context>

<pallas_src>
import functools

import jax
import jax.numpy as jnp
from jax import lax
from jax.experimental import pallas as pl
from jax.experimental.pallas import tpu as pltpu

BN_EPS = 1e-5


def _round_up(v, m):
    return ((v + m - 1) // m) * m


def _conv_relu_stats_kernel(xa_ref, xb_ref, w_ref, b_ref, h_ref, stats_ref,
                            *, n_valid, l_out, l_tile, nb, k_q):
    """Pass 1: conv (im2col matmul) + bias + ReLU tile, plus per-channel partial stats.

    xa_ref    : (nb, C_d, l_tile)      de-interleaved input, block li
    xb_ref    : (nb, C_d, l_tile)      de-interleaved input, block li+1 (halo)
    w_ref     : (C_out, k_q * C_d)     repacked weights
    b_ref     : (C_out, 1)             conv bias (f32)
    h_ref     : (nb, C_out, l_tile)    ReLU(conv + bias), f32
    stats_ref : (1, 1, C_out, 2)       per-tile [sum, sum_sq] over the valid region
    """
    ni = pl.program_id(0)
    li = pl.program_id(1)

    w = w_ref[...]            # hoisted: loaded once per tile
    bias = b_ref[...]         # (C_out, 1), broadcast implicitly over lanes
    c_out = w.shape[0]

    # Validity masks for BN statistics (last length tile / padded batch rows).
    lv = jnp.minimum(jnp.int32(l_tile), jnp.int32(l_out) - li * l_tile)
    col = lax.broadcasted_iota(jnp.int32, (1, l_tile), 1)
    col_mask = col < lv

    s1 = jnp.zeros((c_out, 1), jnp.float32)
    s2 = jnp.zeros((c_out, 1), jnp.float32)

    # nb is small and static (<= 8).  The K-tap loop is gone: taps are stacked once
    # (im2col) and contracted in a single MXU matmul of depth k_q * C_d.
    for b in range(nb):
        xwin = jnp.concatenate([xa_ref[b], xb_ref[b]], axis=-1)      # (C_d, 2*l_tile)
        xst = jnp.concatenate([xwin[:, q:q + l_tile] for q in range(k_q)],
                              axis=0)                                # (k_q*C_d, l_tile)
        acc = lax.dot_general(w, xst, (((1,), (0,)), ((), ())),
                              preferred_element_type=jnp.float32)    # (C_out, l_tile)
        h = jnp.maximum(acc + bias, 0.0)
        h_ref[b] = h.astype(h_ref.dtype)

        row_valid = (ni * nb + b) < n_valid
        m = jnp.logical_and(col_mask, row_valid)
        hm = jnp.where(m, h, 0.0)
        s1 = s1 + jnp.sum(hm, axis=1, keepdims=True)
        s2 = s2 + jnp.sum(hm * hm, axis=1, keepdims=True)

    stats_ref[0, 0] = jnp.concatenate([s1, s2], axis=1)              # (C_out, 2)


def _bn_apply_kernel(h_ref, scale_ref, shift_ref, y_ref):
    """Pass 2: y = h * scale + shift (per-channel affine from global batch stats)."""
    y_ref[...] = h_ref[...] * scale_ref[...] + shift_ref[...]


def convolution_block(x, weight, bias, gamma, beta, *, stride=1,
                      compute_dtype=jnp.float32, batch_tile=8, l_tile=None):
    """x: (N, C_in, L) NCL; weight: (C_out, C_in, K).  Returns (N, C_out, L_out) f32.

    Matches the PyTorch Convolution_Block forward (BatchNorm1d in training mode,
    biased batch statistics, forward only).
    """
    n, c_in, length = x.shape
    c_out, c_in_w, k = weight.shape
    assert c_in_w == c_in
    s = int(stride)

    # Conv1dSamePadding rule.
    padding = k - s - (length % s)
    while padding < 0:
        padding += s
    pad_l = padding // 2
    l_pad = length + padding
    l_out = (l_pad - k) // s + 1

    # Space-to-depth factors: stride-S conv == stride-1 conv over S*C_in channels, K_q taps.
    k_q = -(-k // s)
    c_d = s * c_in

    if l_tile is None:
        l_tile = max(128, min(512, _round_up(l_out, 128)))
    l_tile = _round_up(int(l_tile), 128)
    num_l = -(-l_out // l_tile)
    assert k_q - 1 <= l_tile, "kernel too large for chosen length tile"
    assert k <= (l_tile + 1) * s, "kernel too large for chosen length tile"

    nb = max(1, min(int(batch_tile), n))
    num_n = -(-n // nb)
    n_p = num_n * nb
    l_out_p = num_l * l_tile

    # ---- input re-layout: pad, de-interleave by stride (space-to-depth) ----
    lx = (num_l + 1) * l_tile * s          # covers every tile window incl. halo block
    x_full = jnp.pad(x.astype(jnp.float32),
                     ((0, n_p - n), (0, 0), (pad_l, lx - length - pad_l)))
    xd = x_full.reshape(n_p, c_in, lx // s, s).transpose(0, 3, 1, 2)
    xd = xd.reshape(n_p, c_d, lx // s).astype(compute_dtype)

    # ---- weight re-layout: (C_out, C_in, K) -> (C_out, K_q * S * C_in) ----
    w_p = jnp.pad(weight.astype(jnp.float32), ((0, 0), (0, 0), (0, k_q * s - k)))
    w2 = w_p.reshape(c_out, c_in, k_q, s).transpose(0, 2, 3, 1)
    w2 = w2.reshape(c_out, k_q * c_d).astype(compute_dtype)

    b2 = bias.reshape(c_out, 1).astype(jnp.float32)

    grid = (num_n, num_l)
    itemsize = jnp.dtype(compute_dtype).itemsize
    cparams = pltpu.CompilerParams(
        dimension_semantics=("parallel", "parallel"),
        vmem_limit_bytes=48 * 1024 * 1024)

    cost1 = pl.CostEstimate(
        flops=int(2 * n * l_out * k * c_in * c_out),
        transcendentals=0,
        bytes_accessed=int(xd.size * itemsize + w2.size * itemsize
                           + n_p * c_out * l_out_p * 4
                           + num_n * num_l * c_out * 2 * 4))

    kernel1 = functools.partial(_conv_relu_stats_kernel, n_valid=n, l_out=l_out,
                                l_tile=l_tile, nb=nb, k_q=k_q)

    h, stats = pl.pallas_call(
        kernel1,
        grid=grid,
        in_specs=[
            pl.BlockSpec((nb, c_d, l_tile), lambda ni, li: (ni, 0, li)),
            pl.BlockSpec((nb, c_d, l_tile), lambda ni, li: (ni, 0, li + 1)),
            pl.BlockSpec((c_out, k_q * c_d), lambda ni, li: (0, 0)),
            pl.BlockSpec((c_out, 1), lambda ni, li: (0, 0)),
        ],
        out_specs=(
            pl.BlockSpec((nb, c_out, l_tile), lambda ni, li: (ni, 0, li)),
            pl.BlockSpec((1, 1, c_out, 2), lambda ni, li: (ni, li, 0, 0)),
        ),
        out_shape=(
            jax.ShapeDtypeStruct((n_p, c_out, l_out_p), jnp.float32),
            jax.ShapeDtypeStruct((num_n, num_l, c_out, 2), jnp.float32),
        ),
        compiler_params=cparams,
        cost_estimate=cost1,
    )(xd, xd, w2, b2)

    # ---- finalize global BN statistics (tiny per-channel math) ----
    cnt = jnp.float32(n * l_out)
    s1 = jnp.sum(stats[..., 0], axis=(0, 1))
    s2 = jnp.sum(stats[..., 1], axis=(0, 1))
    mean = s1 / cnt
    var = jnp.maximum(s2 / cnt - mean * mean, 0.0)          # biased (training-mode) variance
    inv = gamma.astype(jnp.float32) / jnp.sqrt(var + BN_EPS)
    scale = inv.reshape(c_out, 1)
    shift = (beta.astype(jnp.float32) - mean * inv).reshape(c_out, 1)

    # ---- pass 2: apply the per-channel affine, tile-wise, in place (P8 aliasing) ----
    y = pl.pallas_call(
        _bn_apply_kernel,
        grid=grid,
        in_specs=[
            pl.BlockSpec((nb, c_out, l_tile), lambda ni, li: (ni, 0, li)),
            pl.BlockSpec((c_out, 1), lambda ni, li: (0, 0)),
            pl.BlockSpec((c_out, 1), lambda ni, li: (0, 0)),
        ],
        out_specs=pl.BlockSpec((nb, c_out, l_tile), lambda ni, li: (ni, 0, li)),
        out_shape=jax.ShapeDtypeStruct((n_p, c_out, l_out_p), jnp.float32),
        input_output_aliases={0: 0},
        compiler_params=cparams,
        cost_estimate=pl.CostEstimate(
            flops=int(2 * n_p * c_out * l_out_p), transcendentals=0,
            bytes_accessed=int(2 * n_p * c_out * l_out_p * 4)),
    )(h, scale, shift)

    return y[:n, :, :l_out]


def _reference(x, weight, bias, gamma, beta, *, stride=1):
    """Pure-JAX reference reproducing the PyTorch forward (f32)."""
    length = x.shape[-1]
    k = weight.shape[-1]
    padding = k - stride - (length % stride)
    while padding < 0:
        padding += stride
    xp = jnp.pad(x, ((0, 0), (0, 0), (padding // 2, padding - padding // 2)))
    out = lax.conv_general_dilated(
        xp, weight, window_strides=(stride,), padding="VALID",
        dimension_numbers=("NCH", "OIH", "NCH"))
    out = out + bias[None, :, None]
    out = jnp.maximum(out, 0.0)
    mean = out.mean(axis=(0, 2), keepdims=True)
    var = ((out - mean) ** 2).mean(axis=(0, 2), keepdims=True)
    return (out - mean) / jnp.sqrt(var + BN_EPS) * gamma[None, :, None] \
        + beta[None, :, None]


if __name__ == "__main__":
    conv_block = jax.jit(
        convolution_block,
        static_argnames=("stride", "compute_dtype", "batch_tile", "l_tile"))

    def run_case(seed, n, c_in, l, c_out, k, stride, compute_dtype, batch_tile, tol):
        key = jax.random.PRNGKey(seed)
        kx, kw, kb, kg, kbe = jax.random.split(key, 5)
        x = jax.random.normal(kx, (n, c_in, l), dtype=jnp.float32)
        w = jax.random.normal(kw, (c_out, c_in, k), dtype=jnp.float32) * 0.1
        b = jax.random.normal(kb, (c_out,), dtype=jnp.float32) * 0.1
        g = 1.0 + 0.1 * jax.random.normal(kg, (c_out,), dtype=jnp.float32)
        be = 0.1 * jax.random.normal(kbe, (c_out,), dtype=jnp.float32)

        out = conv_block(x, w, b, g, be, stride=stride,
                         compute_dtype=compute_dtype, batch_tile=batch_tile)
        out = jax.block_until_ready(out)
        ref = _reference(x, w, b, g, be, stride=stride)
        assert out.shape == ref.shape, (out.shape, ref.shape)
        err = float(jnp.max(jnp.abs(out - ref)))
        assert jnp.allclose(out, ref, atol=tol, rtol=tol), err

    # Stride-1 block (like the 128->128, K=8 blocks of DeepSleepNet), f32 compute.
    run_case(seed=0, n=2, c_in=4, l=16, c_out=8, k=3, stride=1,
             compute_dtype=jnp.float32, batch_tile=2, tol=1e-4)
    # Strided first block (C_in=1, large-ish K, stride>1), bf16 compute + batch padding path.
    run_case(seed=1, n=3, c_in=1, l=64, c_out=16, k=10, stride=4,
             compute_dtype=jnp.bfloat16, batch_tile=2, tol=3e-2)

    print("KERNEL_OK")
</pallas_src>

<mosaic_0001>
module attributes {stable_mosaic.version = 11 : i64} {
  func.func @_bn_apply_kernel(%arg0: i32, %arg1: i32, %arg2: memref<2x8x128xf32, #tpu.memory_space<vmem>>, %arg3: memref<8x1xf32, #tpu.memory_space<vmem>>, %arg4: memref<8x1xf32, #tpu.memory_space<vmem>>, %arg5: memref<2x8x128xf32, #tpu.memory_space<vmem>>) attributes {dimension_semantics = [#tpu.dimension_semantics<parallel>, #tpu.dimension_semantics<parallel>], iteration_bounds = array<i64: 1, 1>, scalar_prefetch = 0 : i64, scratch_operands = 0 : i64, tpu.core_type = #tpu.core_type<tc>, window_params = [{transform_indices = @transform_0, window_bounds = array<i64: 2, 8, 128>}, {pipeline_mode = #tpu.pipeline_mode<synchronous>, transform_indices = @transform_1, window_bounds = array<i64: 8, 1>}, {pipeline_mode = #tpu.pipeline_mode<synchronous>, transform_indices = @transform_2, window_bounds = array<i64: 8, 1>}, {transform_indices = @transform_3, window_bounds = array<i64: 2, 8, 128>}]} {
    %c0 = arith.constant 0 : index
    %c0_0 = arith.constant 0 : index
    %c0_1 = arith.constant 0 : index
    %0 = vector.load %arg2[%c0, %c0_0, %c0_1] : memref<2x8x128xf32, #tpu.memory_space<vmem>>, vector<2x8x128xf32>
    %c0_2 = arith.constant 0 : index
    %c0_3 = arith.constant 0 : index
    %1 = vector.load %arg3[%c0_2, %c0_3] : memref<8x1xf32, #tpu.memory_space<vmem>>, vector<8x1xf32>
    %2 = vector.shape_cast %1 : vector<8x1xf32> to vector<1x8x1xf32>
    %3 = vector.broadcast %2 : vector<1x8x1xf32> to vector<2x8x128xf32>
    %4 = arith.mulf %0, %3 : vector<2x8x128xf32>
    %c0_4 = arith.constant 0 : index
    %c0_5 = arith.constant 0 : index
    %5 = vector.load %arg4[%c0_4, %c0_5] : memref<8x1xf32, #tpu.memory_space<vmem>>, vector<8x1xf32>
    %6 = vector.shape_cast %5 : vector<8x1xf32> to vector<1x8x1xf32>
    %7 = vector.broadcast %6 : vector<1x8x1xf32> to vector<2x8x128xf32>
    %8 = arith.addf %4, %7 : vector<2x8x128xf32>
    %c0_6 = arith.constant 0 : index
    %c0_7 = arith.constant 0 : index
    %c0_8 = arith.constant 0 : index
    %9 = vector.load %arg5[%c0_6, %c0_7, %c0_8] : memref<2x8x128xf32, #tpu.memory_space<vmem>>, vector<2x8x128xf32>
    tpu.vector_store %arg5[%c0_6, %c0_7, %c0_8], %8 {strides = array<i32>} : memref<2x8x128xf32, #tpu.memory_space<vmem>>, vector<2x8x128xf32>,
    return
  }
  func.func @transform_0(%arg0: i32, %arg1: i32) -> (i32, i32, i32) {
    %c0_i32 = arith.constant 0 : i32
    %c0_i32_0 = arith.constant 0 : i32
    return %arg0, %c0_i32, %arg1 : i32, i32, i32
  }
  func.func @transform_1(%arg0: i32, %arg1: i32) -> (i32, i32) {
    %c0_i32 = arith.constant 0 : i32
    %c0_i32_0 = arith.constant 0 : i32
    %c0_i32_1 = arith.constant 0 : i32
    return %c0_i32, %c0_i32_0 : i32, i32
  }
  func.func @transform_2(%arg0: i32, %arg1: i32) -> (i32, i32) {
    %c0_i32 = arith.constant 0 : i32
    %c0_i32_0 = arith.constant 0 : i32
    %c0_i32_1 = arith.constant 0 : i32
    return %c0_i32, %c0_i32_0 : i32, i32
  }
  func.func @transform_3(%arg0: i32, %arg1: i32) -> (i32, i32, i32) {
    %c0_i32 = arith.constant 0 : i32
    %c0_i32_0 = arith.constant 0 : i32
    return %arg0, %c0_i32, %arg1 : i32, i32, i32
  }
}

module attributes {stable_mosaic.version = 11 : i64} {
  func.func @_conv_relu_stats_kernel(%arg0: i32, %arg1: i32, %arg2: memref<2x4x128xf32, #tpu.memory_space<vmem>>, %arg3: memref<2x4x128xf32, #tpu.memory_space<vmem>>, %arg4: memref<8x12xf32, #tpu.memory_space<vmem>>, %arg5: memref<8x1xf32, #tpu.memory_space<vmem>>, %arg6: memref<2x8x128xf32, #tpu.memory_space<vmem>>, %arg7: memref<1x1x8x2xf32, #tpu.memory_space<vmem>>) attributes {dimension_semantics = [#tpu.dimension_semantics<parallel>, #tpu.dimension_semantics<parallel>], iteration_bounds = array<i64: 1, 1>, scalar_prefetch = 0 : i64, scratch_operands = 0 : i64, tpu.core_type = #tpu.core_type<tc>, window_params = [{transform_indices = @transform_0, window_bounds = array<i64: 2, 4, 128>}, {transform_indices = @transform_1, window_bounds = array<i64: 2, 4, 128>}, {pipeline_mode = #tpu.pipeline_mode<synchronous>, transform_indices = @transform_2, window_bounds = array<i64: 8, 12>}, {pipeline_mode = #tpu.pipeline_mode<synchronous>, transform_indices = @transform_3, window_bounds = array<i64: 8, 1>}, {transform_indices = @transform_4, window_bounds = array<i64: 2, 8, 128>}, {transform_indices = @transform_5, window_bounds = array<i64: 1, 1, 8, 2>}]} {
    %c0 = arith.constant 0 : index
    %c0_0 = arith.constant 0 : index
    %0 = vector.load %arg4[%c0, %c0_0] : memref<8x12xf32, #tpu.memory_space<vmem>>, vector<8x12xf32>
    %c0_1 = arith.constant 0 : index
    %c0_2 = arith.constant 0 : index
    %1 = vector.load %arg5[%c0_1, %c0_2] : memref<8x1xf32, #tpu.memory_space<vmem>>, vector<8x1xf32>
    %c128_i32 = arith.constant 128 : i32
    %2 = arith.muli %arg1, %c128_i32 : i32
    %c16_i32 = arith.constant 16 : i32
    %3 = arith.subi %c16_i32, %2 : i32
    %c128_i32_3 = arith.constant 128 : i32
    %4 = arith.minsi %c128_i32_3, %3 : i32
    %5 = tpu.iota {dimensions = array<i32: 1>} : vector<1x128xi32>
    %6 = vector.broadcast %4 : i32 to vector<1x128xi32>
    %7 = arith.cmpi slt, %5, %6 : vector<1x128xi32>
    %cst = arith.constant 0.000000e+00 : f32
    %8 = vector.broadcast %cst : f32 to vector<8x1xf32>
    %cst_4 = arith.constant 0.000000e+00 : f32
    %9 = vector.broadcast %cst_4 : f32 to vector<8x1xf32>
    %c0_5 = arith.constant 0 : index
    %c0_6 = arith.constant 0 : index
    %c0_7 = arith.constant 0 : index
    %10 = vector.load %arg2[%c0_5, %c0_6, %c0_7] : memref<2x4x128xf32, #tpu.memory_space<vmem>>, vector<1x4x128xf32>
    %11 = vector.shape_cast %10 : vector<1x4x128xf32> to vector<4x128xf32>
    %c0_8 = arith.constant 0 : index
    %c0_9 = arith.constant 0 : index
    %c0_10 = arith.constant 0 : index
    %12 = vector.load %arg3[%c0_8, %c0_9, %c0_10] : memref<2x4x128xf32, #tpu.memory_space<vmem>>, vector<1x4x128xf32>
    %13 = vector.shape_cast %12 : vector<1x4x128xf32> to vector<4x128xf32>
    %14 = tpu.concatenate %11, %13 in 1 : vector<4x128xf32>, vector<4x128xf32> -> vector<4x256xf32>
    %15 = vector.extract_strided_slice %14 {offsets = [0, 0], sizes = [4, 128], strides = [1, 1]} : vector<4x256xf32> to vector<4x128xf32>
    %16 = vector.extract_strided_slice %14 {offsets = [0, 1], sizes = [4, 128], strides = [1, 1]} : vector<4x256xf32> to vector<4x128xf32>
    %17 = vector.extract_strided_slice %14 {offsets = [0, 2], sizes = [4, 128], strides = [1, 1]} : vector<4x256xf32> to vector<4x128xf32>
    %18 = tpu.concatenate %15, %16, %17 in 0 : vector<4x128xf32>, vector<4x128xf32>, vector<4x128xf32> -> vector<12x128xf32>
    %cst_11 = arith.constant dense<0.000000e+00> : vector<8x128xf32>
    %19 = tpu.matmul %0, %18, %cst_11 {dimension_numbers = #tpu.dot_dimension_numbers<[1], [0], [0], [1], [0, 0, 1, 1], [], []>} : vector<8x12xf32>, vector<12x128xf32>, vector<8x128xf32> -> vector<8x128xf32>
    %20 = vector.broadcast %1 : vector<8x1xf32> to vector<8x128xf32>
    %21 = arith.addf %19, %20 : vector<8x128xf32>
    %cst_12 = arith.constant 0.000000e+00 : f32
    %22 = vector.broadcast %cst_12 : f32 to vector<8x128xf32>
    %23 = arith.maximumf %21, %22 : vector<8x128xf32>
    %c0_13 = arith.constant 0 : index
    %c0_14 = arith.constant 0 : index
    %c0_15 = arith.constant 0 : index
    %24 = vector.load %arg6[%c0_13, %c0_14, %c0_15] : memref<2x8x128xf32, #tpu.memory_space<vmem>>, vector<1x8x128xf32>
    %25 = vector.shape_cast %24 : vector<1x8x128xf32> to vector<8x128xf32>
    %26 = vector.shape_cast %23 : vector<8x128xf32> to vector<1x8x128xf32>
    tpu.vector_store %arg6[%c0_13, %c0_14, %c0_15], %26 {strides = array<i32>} : memref<2x8x128xf32, #tpu.memory_space<vmem>>, vector<1x8x128xf32>,
    %c2_i32 = arith.constant 2 : i32
    %27 = arith.muli %arg0, %c2_i32 : i32
    %c0_i32 = arith.constant 0 : i32
    %28 = arith.addi %27, %c0_i32 : i32
    %c2_i32_16 = arith.constant 2 : i32
    %29 = arith.cmpi slt, %28, %c2_i32_16 : i32
    %30 = vector.broadcast %29 : i1 to vector<1x128xi1>
    %31 = arith.andi %7, %30 : vector<1x128xi1>
    %cst_17 = arith.constant 0.000000e+00 : f32
    %32 = vector.shape_cast %31 : vector<1x128xi1> to vector<1x128xi1>
    %33 = vector.broadcast %32 : vector<1x128xi1> to vector<8x128xi1>
    %34 = vector.broadcast %cst_17 : f32 to vector<8x128xf32>
    %35 = arith.select %33, %23, %34 : vector<8x128xi1>, vector<8x128xf32>
    %cst_18 = arith.constant dense<0.000000e+00> : vector<8xf32>
    %36 = vector.multi_reduction <add>, %35, %cst_18 [1] : vector<8x128xf32> to vector<8xf32>
    %37 = vector.shape_cast %36 : vector<8xf32> to vector<8x1xf32>
    %38 = arith.addf %8, %37 : vector<8x1xf32>
    %39 = arith.mulf %35, %35 : vector<8x128xf32>
    %cst_19 = arith.constant dense<0.000000e+00> : vector<8xf32>
    %40 = vector.multi_reduction <add>, %39, %cst_19 [1] : vector<8x128xf32> to vector<8xf32>
    %41 = vector.shape_cast %40 : vector<8xf32> to vector<8x1xf32>
    %42 = arith.addf %9, %41 : vector<8x1xf32>
    %c1 = arith.constant 1 : index
    %c0_20 = arith.constant 0 : index
    %c0_21 = arith.constant 0 : index
    %43 = vector.load %arg2[%c1, %c0_20, %c0_21] : memref<2x4x128xf32, #tpu.memory_space<vmem>>, vector<1x4x128xf32>
    %44 = vector.shape_cast %43 : vector<1x4x128xf32> to vector<4x128xf32>
    %c1_22 = arith.constant 1 : index
    %c0_23 = arith.constant 0 : index
    %c0_24 = arith.constant 0 : index
    %45 = vector.load %arg3[%c1_22, %c0_23, %c0_24] : memref<2x4x128xf32, #tpu.memory_space<vmem>>, vector<1x4x128xf32>
    %46 = vector.shape_cast %45 : vector<1x4x128xf32> to vector<4x128xf32>
    %47 = tpu.concatenate %44, %46 in 1 : vector<4x128xf32>, vector<4x128xf32> -> vector<4x256xf32>
    %48 = vector.extract_strided_slice %47 {offsets = [0, 0], sizes = [4, 128], strides = [1, 1]} : vector<4x256xf32> to vector<4x128xf32>
    %49 = vector.extract_strided_slice %47 {offsets = [0, 1], sizes = [4, 128], strides = [1, 1]} : vector<4x256xf32> to vector<4x128xf32>
    %50 = vector.extract_strided_slice %47 {offsets = [0, 2], sizes = [4, 128], strides = [1, 1]} : vector<4x256xf32> to vector<4x128xf32>
    %51 = tpu.concatenate %48, %49, %50 in 0 : vector<4x128xf32>, vector<4x128xf32>, vector<4x128xf32> -> vector<12x128xf32>
    %cst_25 = arith.constant dense<0.000000e+00> : vector<8x128xf32>
    %52 = tpu.matmul %0, %51, %cst_25 {dimension_numbers = #tpu.dot_dimension_numbers<[1], [0], [0], [1], [0, 0, 1, 1], [], []>} : vector<8x12xf32>, vector<12x128xf32>, vector<8x128xf32> -> vector<8x128xf32>
    %53 = vector.broadcast %1 : vector<8x1xf32> to vector<8x128xf32>
    %54 = arith.addf %52, %53 : vector<8x128xf32>
    %cst_26 = arith.constant 0.000000e+00 : f32
    %55 = vector.broadcast %cst_26 : f32 to vector<8x128xf32>
    %56 = arith.maximumf %54, %55 : vector<8x128xf32>
    %c1_27 = arith.constant 1 : index
    %c0_28 = arith.constant 0 : index
    %c0_29 = arith.constant 0 : index
    %57 = vector.load %arg6[%c1_27, %c0_28, %c0_29] : memref<2x8x128xf32, #tpu.memory_space<vmem>>, vector<1x8x128xf32>
    %58 = vector.shape_cast %57 : vector<1x8x128xf32> to vector<8x128xf32>
    %59 = vector.shape_cast %56 : vector<8x128xf32> to vector<1x8x128xf32>
    tpu.vector_store %arg6[%c1_27, %c0_28, %c0_29], %59 {strides = array<i32>} : memref<2x8x128xf32, #tpu.memory_space<vmem>>, vector<1x8x128xf32>,
    %c2_i32_30 = arith.constant 2 : i32
    %60 = arith.muli %arg0, %c2_i32_30 : i32
    %c1_i32 = arith.constant 1 : i32
    %61 = arith.addi %60, %c1_i32 : i32
    %c2_i32_31 = arith.constant 2 : i32
    %62 = arith.cmpi slt, %61, %c2_i32_31 : i32
    %63 = vector.broadcast %62 : i1 to vector<1x128xi1>
    %64 = arith.andi %7, %63 : vector<1x128xi1>
    %cst_32 = arith.constant 0.000000e+00 : f32
    %65 = vector.shape_cast %64 : vector<1x128xi1> to vector<1x128xi1>
    %66 = vector.broadcast %65 : vector<1x128xi1> to vector<8x128xi1>
    %67 = vector.broadcast %cst_32 : f32 to vector<8x128xf32>
    %68 = arith.select %66, %56, %67 : vector<8x128xi1>, vector<8x128xf32>
    %cst_33 = arith.constant dense<0.000000e+00> : vector<8xf32>
    %69 = vector.multi_reduction <add>, %68, %cst_33 [1] : vector<8x128xf32> to vector<8xf32>
    %70 = vector.shape_cast %69 : vector<8xf32> to vector<8x1xf32>
    %71 = arith.addf %38, %70 : vector<8x1xf32>
    %72 = arith.mulf %68, %68 : vector<8x128xf32>
    %cst_34 = arith.constant dense<0.000000e+00> : vector<8xf32>
    %73 = vector.multi_reduction <add>, %72, %cst_34 [1] : vector<8x128xf32> to vector<8xf32>
    %74 = vector.shape_cast %73 : vector<8xf32> to vector<8x1xf32>
    %75 = arith.addf %42, %74 : vector<8x1xf32>
    %76 = tpu.concatenate %71, %75 in 1 : vector<8x1xf32>, vector<8x1xf32> -> vector<8x2xf32>
    %c0_35 = arith.constant 0 : index
    %c0_36 = arith.constant 0 : index
    %c0_37 = arith.constant 0 : index
    %c0_38 = arith.constant 0 : index
    %77 = vector.load %arg7[%c0_35, %c0_36, %c0_37, %c0_38] : memref<1x1x8x2xf32, #tpu.memory_space<vmem>>, vector<1x1x8x2xf32>
    %78 = vector.shape_cast %77 : vector<1x1x8x2xf32> to vector<8x2xf32>
    %79 = vector.shape_cast %76 : vector<8x2xf32> to vector<1x1x8x2xf32>
    tpu.vector_store %arg7[%c0_35, %c0_36, %c0_37, %c0_38], %79 {strides = array<i32>} : memref<1x1x8x2xf32, #tpu.memory_space<vmem>>, vector<1x1x8x2xf32>,
    return
  }
  func.func @transform_0(%arg0: i32, %arg1: i32) -> (i32, i32, i32) {
    %c0_i32 = arith.constant 0 : i32
    %c0_i32_0 = arith.constant 0 : i32
    return %arg0, %c0_i32, %arg1 : i32, i32, i32
  }
  func.func @transform_1(%arg0: i32, %arg1: i32) -> (i32, i32, i32) {
    %c1_i32 = arith.constant 1 : i32
    %0 = arith.addi %arg1, %c1_i32 : i32
    %c0_i32 = arith.constant 0 : i32
    %c0_i32_0 = arith.constant 0 : i32
    return %arg0, %c0_i32, %0 : i32, i32, i32
  }
  func.func @transform_2(%arg0: i32, %arg1: i32) -> (i32, i32) {
    %c0_i32 = arith.constant 0 : i32
    %c0_i32_0 = arith.constant 0 : i32
    %c0_i32_1 = arith.constant 0 : i32
    return %c0_i32, %c0_i32_0 : i32, i32
  }
  func.func @transform_3(%arg0: i32, %arg1: i32) -> (i32, i32) {
    %c0_i32 = arith.constant 0 : i32
    %c0_i32_0 = arith.constant 0 : i32
    %c0_i32_1 = arith.constant 0 : i32
    return %c0_i32, %c0_i32_0 : i32, i32
  }
  func.func @transform_4(%arg0: i32, %arg1: i32) -> (i32, i32, i32) {
    %c0_i32 = arith.constant 0 : i32
    %c0_i32_0 = arith.constant 0 : i32
    return %arg0, %c0_i32, %arg1 : i32, i32, i32
  }
  func.func @transform_5(%arg0: i32, %arg1: i32) -> (i32, i32, i32, i32) {
    %c0_i32 = arith.constant 0 : i32
    %c0_i32_0 = arith.constant 0 : i32
    %c0_i32_1 = arith.constant 0 : i32
    return %arg0, %arg1, %c0_i32, %c0_i32_0 : i32, i32, i32, i32
  }
}

</mosaic_0001>

<llo_original>
// kernel: convolution_block.3
$region0: #{convolution_block.3}
  #allocation0 [shape = 'u32[]', space=smem, size = 0x4, offset = 0x4, fixed_abs, tag = 'smem constant byte address 0x4 - core index']
  #allocation1 [shape = 'u32[144,128]{1,0:T(1,128)}', space=vmem, size = 0x12000, scoped, tag = 'internal scratch']
  %s0 = inlined_call_operand.vmem [shape: f32[2,8,128], index: 0, kind: input, shape index: {}, may-alias: {0,3}]
  %s1 = inlined_call_operand.vmem [shape: f32[8,1], index: 1, kind: input, shape index: {}]
  %s2 = inlined_call_operand.vmem [shape: f32[8,1], index: 2, kind: input, shape index: {}]
  %s3 = inlined_call_operand.vmem [shape: f32[2,8,128], index: 3, kind: output, shape index: {}, may-alias: {0,3}]
  %s4 = sld [smem:[#allocation0]]
  $region22: #{convolution_block.3} parent=0
    _
  %s6 = ssub.s32 1, %s4
  %s7 = scalar_select 0, %s6, %s4
  // Predicated region
  $region2: #{convolution_block.3} parent=0 // pred_check
    _
  $region3: #{convolution_block.3} parent=0 // pred_check_branch
    %9 = sbr.rel (0) target = $region5
  $region4: #{convolution_block.3} parent=0 // pred_region
    _
  $region5: #{convolution_block.3} parent=0 // pred_fallthru
    _
  // Predicated region
  $region6: #{convolution_block.3} parent=0 // pred_check
    _
  $region7: #{convolution_block.3} parent=0 // pred_check_branch
    %11 = sbr.rel (0) target = $region9
  $region8: #{convolution_block.3} parent=0 // pred_region
    _
  $region9: #{convolution_block.3} parent=0 // pred_fallthru
    _
  // Predicated region
  $region10: #{convolution_block.3} parent=0 // pred_check
    _
  $region11: #{convolution_block.3} parent=0 // pred_check_branch
    %13 = sbr.rel (0) target = $region13
  $region12: #{convolution_block.3} parent=0 // pred_region
    _
  $region13: #{convolution_block.3} parent=0 // pred_fallthru
    _
  %v14 = vld [vmem:[%s0] sm:$0xff]
  %v15 = vld [vmem:[%s0 + $0x8] sm:$0xff]
  %v16 = vld [vmem:[%s1] sm:$0xff]
  %18 = vset.pattern.permute.xlu0 0
  %19 = vperm.xlu0 %18, %v16
  %v20 = vpop.permute.xlu0 %19
  %v22 = vmul.f32 %v14, %v20
  %v23 = vmul.f32 %v15, %v20
  %v24 = vld [vmem:[%s2] sm:$0xff]
  %26 = vset.pattern.permute.xlu0 0
  %27 = vperm.xlu0 %26, %v24
  %v28 = vpop.permute.xlu0 %27
  %v30 = vadd.f32 %v22, %v28
  %v31 = vadd.f32 %v23, %v28
  %32 = vst [vmem:[%s3] sm:$0xff] %v30
  %33 = vst [vmem:[%s3 + $0x8] sm:$0xff] %v31
  // Predicated region
  $region14: #{convolution_block.3} parent=0 // pred_check
    _
  $region15: #{convolution_block.3} parent=0 // pred_check_branch
    %35 = sbr.rel (0) target = $region17
  $region16: #{convolution_block.3} parent=0 // pred_region
    _
  $region17: #{convolution_block.3} parent=0 // pred_fallthru
    _
  // Predicated region
  $region18: #{convolution_block.3} parent=0 // pred_check
    _
  $region19: #{convolution_block.3} parent=0 // pred_check_branch
    %37 = sbr.rel (0) target = $region21
  $region20: #{convolution_block.3} parent=0 // pred_region
    _
  $region21: #{convolution_block.3} parent=0 // pred_fallthru
    _

// kernel: convolution_block.2
$region0: #{convolution_block.2}
  #allocation0 [shape = 'u32[]', space=smem, size = 0x4, offset = 0x4, fixed_abs, tag = 'smem constant byte address 0x4 - core index']
  #allocation1 [shape = 'u32[144,128]{1,0:T(1,128)}', space=vmem, size = 0x12000, scoped, tag = 'internal scratch']
  %s0 = inlined_call_operand.vmem [shape: f32[2,4,256], index: 0, kind: input, shape index: {}, may-alias: {0,1}]
  %s1 = inlined_call_operand.vmem [shape: f32[2,4,256], index: 1, kind: input, shape index: {}, may-alias: {0,1}]
  %s2 = inlined_call_operand.vmem [shape: f32[8,12], index: 2, kind: input, shape index: {}]
  %s3 = inlined_call_operand.vmem [shape: f32[8,1], index: 3, kind: input, shape index: {}]
  %s4 = inlined_call_operand.vmem [shape: f32[2,8,128], index: 4, kind: output, shape index: {0}]
  %s5 = inlined_call_operand.vmem [shape: f32[1,1,8,2], index: 5, kind: output, shape index: {1}]
  %6 = xla_tuple %s4, %s5
  %s7 = sld [smem:[#allocation0]]
  $region116: #{convolution_block.2} parent=0
    _
  %s9 = ssub.s32 1, %s7
  %s10 = scalar_select 0, %s9, %s7
  $region1: #{convolution_block.2} parent=0
    #allocation2 [shape = 'u8[4096]{0}', space=vmem, size = 0x1000, scoped, tag = 'input window, operand 0, single buffered']
    #allocation3 [shape = 'u8[4096]{0}', space=vmem, size = 0x1000, scoped, tag = 'input window, operand 1, single buffered']
    // Predicated region
    $region2: #{convolution_block.2} parent=1 // pred_check
      _
    $region3: #{convolution_block.2} parent=1 // pred_check_branch
      %12 = sbr.rel (0) target = $region5
    $region4: #{convolution_block.2} parent=1 // pred_region
      // Predicated region
      $region6: #{convolution_block.2} parent=4 // pred_check
        _
      $region7: #{convolution_block.2} parent=4 // pred_check_branch
        %14 = sbr.rel (0) target = $region9
      $region8: #{convolution_block.2} parent=4 // pred_region
        // Predicated region
        $region10: #{convolution_block.2} parent=8 // pred_check
          _
        $region11: #{convolution_block.2} parent=8 // pred_check_branch
          %16 = sbr.rel target = $region13
        $region12: #{convolution_block.2} parent=8 // pred_region
          // Predicated region
          $region25: #{convolution_block.2} parent=12 // pred_check
            _
          $region26: #{convolution_block.2} parent=12 // pred_check_branch
            %33 = sbr.rel (0) target = $region28
          $region27: #{convolution_block.2} parent=12 // pred_region
            loop: start=0, step=1, limit=1
            $region29: #{convolution_block.2} parent=27 // loop_pre_header
              _
            $region30: #{convolution_block.2} parent=27 // loop_header
              %s35 = sphi 0, %s39
              %p36 = scmp.ge.s32.totalorder %s35, 1
              %s40 = sphi %s0, %s0
              %s41 = sphi [#allocation2], [#allocation2]
            $region31: #{convolution_block.2} parent=27 // loop_header_branch
              %38 = sbr.rel (%p36) target = $region35
            $region32: #{convolution_block.2} parent=27 // loop_body
              _
            $region33: #{convolution_block.2} parent=27 // loop_footer
              %s39 = sadd.s32 1, %s35
            $region34: #{convolution_block.2} parent=27 // loop_footer_branch
              %34 = sbr.rel target = $region30
            $region35: #{convolution_block.2} parent=27 // loop_exit
              _
            loop: start=0, step=1, limit=1
            $region36: #{convolution_block.2} parent=27 // loop_pre_header
              _
            $region37: #{convolution_block.2} parent=27 // loop_header
              %s44 = sphi 0, %s48
              %p45 = scmp.ge.s32.totalorder %s44, 1
              %s49 = sphi %s0, %s0
              %s50 = sphi [#allocation2], [#allocation2]
            $region38: #{convolution_block.2} parent=27 // loop_header_branch
              %47 = sbr.rel (%p45) target = $region42
            $region39: #{convolution_block.2} parent=27 // loop_body
              %v51 = vld [vmem:[%s49] sm:$0xf]
              %52 = vst [vmem:[%s50] sm:$0xf] %v51
              %v53 = vld [vmem:[%s49 + $0x8] sm:$0xf]
              %54 = vst [vmem:[%s50 + $0x4] sm:$0xf] %v53
            $region40: #{convolution_block.2} parent=27 // loop_footer
              %s48 = sadd.s32 1, %s44
            $region41: #{convolution_block.2} parent=27 // loop_footer_branch
              %43 = sbr.rel target = $region37
            $region42: #{convolution_block.2} parent=27 // loop_exit
              _
          $region28: #{convolution_block.2} parent=12 // pred_fallthru
            _
        $region13: #{convolution_block.2} parent=8 // pred_fallthru
          _
        // Predicated region
        $region14: #{convolution_block.2} parent=8 // pred_check
          _
        $region15: #{convolution_block.2} parent=8 // pred_check_branch
          %18 = sbr.rel (0) target = $region17
        $region16: #{convolution_block.2} parent=8 // pred_region
          loop: start=0, step=1, limit=1
          $region18: #{convolution_block.2} parent=16 // loop_pre_header
            _
          $region19: #{convolution_block.2} parent=16 // loop_header
            %s21 = sphi 0, %s25
            %p22 = scmp.ge.s32.totalorder %s21, 1
            %s26 = sphi %s0, %s0
            %s27 = sphi [#allocation2], [#allocation2]
          $region20: #{convolution_block.2} parent=16 // loop_header_branch
            %24 = sbr.rel (%p22) target = $region24
          $region21: #{convolution_block.2} parent=16 // loop_body
            %v28 = vld [vmem:[%s26] sm:$0xf]
            %29 = vst [vmem:[%s27] sm:$0xf] %v28
            %v30 = vld [vmem:[%s26 + $0x8] sm:$0xf]
            %31 = vst [vmem:[%s27 + $0x4] sm:$0xf] %v30
          $region22: #{convolution_block.2} parent=16 // loop_footer
            %s25 = sadd.s32 1, %s21
          $region23: #{convolution_block.2} parent=16 // loop_footer_branch
            %20 = sbr.rel target = $region19
          $region24: #{convolution_block.2} parent=16 // loop_exit
            _
        $region17: #{convolution_block.2} parent=8 // pred_fallthru
          _
      $region9: #{convolution_block.2} parent=4 // pred_fallthru
        _
      %55 = vnop
    $region5: #{convolution_block.2} parent=1 // pred_fallthru
      _
    // Predicated region
    $region43: #{convolution_block.2} parent=1 // pred_check
      _
    $region44: #{convolution_block.2} parent=1 // pred_check_branch
      %57 = sbr.rel (0) target = $region46
    $region45: #{convolution_block.2} parent=1 // pred_region
      %s58 = sadd.s32 0, 1
      %s59 = smul.addr %s58, 4
      %s60 = scalar_lea.vmem %s1, %s59
      // Predicated region
      $region47: #{convolution_block.2} parent=45 // pred_check
        _
      $region48: #{convolution_block.2} parent=45 // pred_check_branch
        %62 = sbr.rel (0) target = $region50
      $region49: #{convolution_block.2} parent=45 // pred_region
        // Predicated region
        $region51: #{convolution_block.2} parent=49 // pred_check
          _
        $region52: #{convolution_block.2} parent=49 // pred_check_branch
          %64 = sbr.rel target = $region54
        $region53: #{convolution_block.2} parent=49 // pred_region
          // Predicated region
          $region66: #{convolution_block.2} parent=53 // pred_check
            _
          $region67: #{convolution_block.2} parent=53 // pred_check_branch
            %81 = sbr.rel (0) target = $region69
          $region68: #{convolution_block.2} parent=53 // pred_region
            loop: start=0, step=1, limit=1
            $region70: #{convolution_block.2} parent=68 // loop_pre_header
              _
            $region71: #{convolution_block.2} parent=68 // loop_header
              %s83 = sphi 0, %s87
              %p84 = scmp.ge.s32.totalorder %s83, 1
              %s88 = sphi %s60, %s60
              %s89 = sphi [#allocation3], [#allocation3]
            $region72: #{convolution_block.2} parent=68 // loop_header_branch
              %86 = sbr.rel (%p84) target = $region76
            $region73: #{convolution_block.2} parent=68 // loop_body
              _
            $region74: #{convolution_block.2} parent=68 // loop_footer
              %s87 = sadd.s32 1, %s83
            $region75: #{convolution_block.2} parent=68 // loop_footer_branch
              %82 = sbr.rel target = $region71
            $region76: #{convolution_block.2} parent=68 // loop_exit
              _
            loop: start=0, step=1, limit=1
            $region77: #{convolution_block.2} parent=68 // loop_pre_header
              _
            $region78: #{convolution_block.2} parent=68 // loop_header
              %s92 = sphi 0, %s96
              %p93 = scmp.ge.s32.totalorder %s92, 1
              %s97 = sphi %s60, %s60
              %s98 = sphi [#allocation3], [#allocation3]
            $region79: #{convolution_block.2} parent=68 // loop_header_branch
              %95 = sbr.rel (%p93) target = $region83
            $region80: #{convolution_block.2} parent=68 // loop_body
              %v99 = vld [vmem:[%s97] sm:$0xf]
              %100 = vst [vmem:[%s98] sm:$0xf] %v99
              %v101 = vld [vmem:[%s97 + $0x8] sm:$0xf]
              %102 = vst [vmem:[%s98 + $0x4] sm:$0xf] %v101
            $region81: #{convolution_block.2} parent=68 // loop_footer
              %s96 = sadd.s32 1, %s92
            $region82: #{convolution_block.2} parent=68 // loop_footer_branch
              %91 = sbr.rel target = $region78
            $region83: #{convolution_block.2} parent=68 // loop_exit
              _
          $region69: #{convolution_block.2} parent=53 // pred_fallthru
            _
        $region54: #{convolution_block.2} parent=49 // pred_fallthru
          _
        // Predicated region
        $region55: #{convolution_block.2} parent=49 // pred_check
          _
        $region56: #{convolution_block.2} parent=49 // pred_check_branch
          %66 = sbr.rel (0) target = $region58
        $region57: #{convolution_block.2} parent=49 // pred_region
          loop: start=0, step=1, limit=1
          $region59: #{convolution_block.2} parent=57 // loop_pre_header
            _
          $region60: #{convolution_block.2} parent=57 // loop_header
            %s69 = sphi 0, %s73
            %p70 = scmp.ge.s32.totalorder %s69, 1
            %s74 = sphi %s60, %s60
            %s75 = sphi [#allocation3], [#allocation3]
          $region61: #{convolution_block.2} parent=57 // loop_header_branch
            %72 = sbr.rel (%p70) target = $region65
          $region62: #{convolution_block.2} parent=57 // loop_body
            %v76 = vld [vmem:[%s74] sm:$0xf]
            %77 = vst [vmem:[%s75] sm:$0xf] %v76
            %v78 = vld [vmem:[%s74 + $0x8] sm:$0xf]
            %79 = vst [vmem:[%s75 + $0x4] sm:$0xf] %v78
          $region63: #{convolution_block.2} parent=57 // loop_footer
            %s73 = sadd.s32 1, %s69
          $region64: #{convolution_block.2} parent=57 // loop_footer_branch
            %68 = sbr.rel target = $region60
          $region65: #{convolution_block.2} parent=57 // loop_exit
            _
        $region58: #{convolution_block.2} parent=49 // pred_fallthru
          _
      $region50: #{convolution_block.2} parent=45 // pred_fallthru
        _
      %103 = vnop
    $region46: #{convolution_block.2} parent=1 // pred_fallthru
      _
    // Predicated region
    $region84: #{convolution_block.2} parent=1 // pred_check
      _
    $region85: #{convolution_block.2} parent=1 // pred_check_branch
      %105 = sbr.rel (0) target = $region87
    $region86: #{convolution_block.2} parent=1 // pred_region
      _
    $region87: #{convolution_block.2} parent=1 // pred_fallthru
      _
    // Predicated region
    $region88: #{convolution_block.2} parent=1 // pred_check
      _
    $region89: #{convolution_block.2} parent=1 // pred_check_branch
      %107 = sbr.rel (0) target = $region91
    $region90: #{convolution_block.2} parent=1 // pred_region
      _
    $region91: #{convolution_block.2} parent=1 // pred_fallthru
      _
    // Predicated region
    $region92: #{convolution_block.2} parent=1 // pred_check
      _
    $region93: #{convolution_block.2} parent=1 // pred_check_branch
      %109 = sbr.rel (0) target = $region95
    $region94: #{convolution_block.2} parent=1 // pred_region
      _
    $region95: #{convolution_block.2} parent=1 // pred_fallthru
      _
    // Predicated region
    $region96: #{convolution_block.2} parent=1 // pred_check
      _
    $region97: #{convolution_block.2} parent=1 // pred_check_branch
      %111 = sbr.rel (0) target = $region99
    $region98: #{convolution_block.2} parent=1 // pred_region
      _
    $region99: #{convolution_block.2} parent=1 // pred_fallthru
      _
    %s112 = sadd.s32 0, 1
    %v113 = vld [vmem:[%s2] sm:$0xff]
    %v114 = vld [vmem:[%s3] sm:$0xff]
    %s115 = smul.u32 0, 128
    %s116 = ssub.s32 16, %s115
    %p117 = scmp.lt.s32.totalorder %s116, 128
    %s118 = scalar_select %p117, %s116, 128
    %v119 = vlaneseq
    %v120 = vand.u32 %v119, 127
    %v121 = vstv %s118
    %vm122 = vcmp.lt.s32.totalorder %v120, %v121
    %v123 = vld [vmem:[#allocation2] sm:$0xf]
    %v124 = vld [vmem:[#allocation3] sm:$0xf]
    %v127 = vrot.slane %v123, 4
    %v128 = vrot.slane %v124, 4
    %129 = vrot.lane.b32.xlu0 %v127, 127
    %v130 = vpop.permute.xlu0 %129
    %131 = vrot.lane.b32.xlu0 %v128, 127
    %v132 = vpop.permute.xlu0 %131
    %vm133 = vcmask 1039360
    %v134 = vsel %vm133, %v130, %v132
    %136 = vrot.lane.b32.xlu0 %v123, 126
    %v137 = vpop.permute.xlu0 %136
    %138 = vrot.lane.b32.xlu0 %v124, 126
    %v139 = vpop.permute.xlu0 %138
    %vm140 = vcmask 1031168
    %v141 = vsel %vm140, %v137, %v139
    %vm142 = vcmask 1043456
    %v143 = vsel %vm142, %v123, %v134
    %145 = vset.pattern.permute.xlu0 0
    %146 = vperm.xlu0 %145, %v114
    %v147 = vpop.permute.xlu0 %146
    %vm149 = vcmask 97280
    %v151 = vsel %vm149, %v113, 0
    %v153 = vsel %vm142, %v141, 0
    %155 = vmatprep.subr.mxu0 0.0
    %156 = vmatpush1.msra.mxu0 %v143
    %157 = vmatprep.subr.mxu0 0.0
    %158 = vmatpush1.msra.mxu0 %v153
    %159 = vmatprep.subr.mxu0 0.0
    %160 = vmatpush1.msra.mxu0 0.0
    %161 = vmatprep.subr.mxu0 0.0
    %162 = vmatpush1.msra.mxu0 0.0
    %163 = vmatprep.subr.mxu0 0.0
    %164 = vmatpush1.msra.mxu0 0.0
    %165 = vmatprep.subr.mxu0 0.0
    %166 = vmatpush1.msra.mxu0 0.0
    %167 = vmatprep.subr.mxu0 0.0
    %168 = vmatpush1.msra.mxu0 0.0
    %169 = vmatprep.subr.mxu0 0.0
    %170 = vmatpush1.msra.mxu0 0.0
    %171 = vmatprep.subr.mxu0 0.0
    %172 = vmatpush1.msra.mxu0 0.0
    %173 = vmatprep.subr.mxu0 0.0
    %174 = vmatpush1.msra.mxu0 0.0
    %175 = vmatprep.subr.mxu0 0.0
    %176 = vmatpush1.msra.mxu0 0.0
    %177 = vmatprep.subr.mxu0 0.0
    %178 = vmatpush1.msra.mxu0 0.0
    %179 = vmatprep.subr.mxu0 0.0
    %180 = vmatpush1.msra.mxu0 0.0
    %181 = vmatprep.subr.mxu0 0.0
    %182 = vmatpush1.msra.mxu0 0.0
    %183 = vmatprep.subr.mxu0 0.0
    %184 = vmatpush1.msra.mxu0 0.0
    %185 = vmatprep.subr.mxu0 0.0
    %186 = vmatpush1.msra.mxu0 0.0
    %187 = vmatprep.subr.mxu0 0.0
    %188 = vmatpush1.msra.mxu0 0.0
    %189 = vmatprep.subr.mxu0 0.0
    %190 = vmatpush1.msra.mxu0 0.0
    %191 = vmatprep.subr.mxu0 0.0
    %192 = vmatpush1.msra.mxu0 0.0
    %193 = vmatprep.subr.mxu0 0.0
    %194 = vmatpush1.msra.mxu0 0.0
    %195 = vmatprep.subr.mxu0 0.0
    %196 = vmatpush1.msra.mxu0 0.0
    %197 = vmatprep.subr.mxu0 0.0
    %198 = vmatpush1.msra.mxu0 0.0
    %199 = vmatprep.subr.mxu0 0.0
    %200 = vmatpush1.msra.mxu0 0.0
    %201 = vmatprep.subr.mxu0 0.0
    %202 = vmatpush1.msra.mxu0 0.0
    %203 = vmatprep.subr.mxu0 0.0
    %204 = vmatpush1.msra.mxu0 0.0
    %205 = vmatprep.subr.mxu0 0.0
    %206 = vmatpush1.msra.mxu0 0.0
    %207 = vmatprep.subr.mxu0 0.0
    %208 = vmatpush1.msra.mxu0 0.0
    %209 = vmatprep.subr.mxu0 0.0
    %210 = vmatpush1.msra.mxu0 0.0
    %211 = vmatprep.subr.mxu0 0.0
    %212 = vmatpush1.msra.mxu0 0.0
    %213 = vmatprep.subr.mxu0 0.0
    %214 = vmatpush1.msra.mxu0 0.0
    %215 = vmatprep.subr.mxu0 0.0
    %216 = vmatpush1.msra.mxu0 0.0
    %217 = vmatprep.subr.mxu0 0.0
    %218 = vmatpush1.msra.mxu0 0.0
    %219 = vmatprep.mubr.f32.mxu0 0.0
    %220 = vmatmul.mubr.f32.gmra.mrb[0].mxu0 %v151
    %v221 = vpop.f32.mrb[0].mxu0
    %v222 = vadd.f32 %v147, %v221
    %v223 = vpop.f32.mrb[0].mxu0
    %224 = vdwg.mxu0
    %v225 = vmax.f32 %v222, 0.0
    %226 = vst [vmem:[%s4] sm:$0xff] %v225
    %s227 = smul.u32 0, 2
    %p228 = scmp.lt.s32.totalorder %s227, 2
    %s229 = scalar_select %p228, 1, 0
    %v230 = vstv %s229
    %vm231 = vcmp.eq.s32.totalorder %v230, 1
    %vm232 = vmand %vm122, %vm231
    %v233 = vsel %vm232, 1, 0
    %vm234 = vcmp.eq.s32.totalorder %v233, 1
    %v235 = vsel %vm234, %v225, 0.0
    %236 = vadd.xlane.f32.xlu0 %v235
    %v237 = vpop.xlane.xlu0 %236
    %v238 = vadd.f32 %v237, 0.0
    %v239 = vmul.f32 %v235, %v235
    %240 = vadd.xlane.f32.xlu0 %v239
    %v241 = vpop.xlane.xlu0 %240
    %v242 = vadd.f32 %v241, 0.0
    %s243 = scalar_lea.vmem [#allocation2], 4
    %v244 = vld [vmem:[%s243] sm:$0xf]
    %s245 = scalar_lea.vmem [#allocation3], 4
    %v246 = vld [vmem:[%s245] sm:$0xf]
    %v249 = vrot.slane %v244, 4
    %v250 = vrot.slane %v246, 4
    %251 = vrot.lane.b32.xlu0 %v249, 127
    %v252 = vpop.permute.xlu0 %251
    %253 = vrot.lane.b32.xlu0 %v250, 127
    %v254 = vpop.permute.xlu0 %253
    %v255 = vsel %vm133, %v252, %v254
    %257 = vrot.lane.b32.xlu0 %v244, 126
    %v258 = vpop.permute.xlu0 %257
    %259 = vrot.lane.b32.xlu0 %v246, 126
    %v260 = vpop.permute.xlu0 %259
    %v261 = vsel %vm140, %v258, %v260
    %v262 = vsel %vm142, %v244, %v255
    %v263 = vsel %vm142, %v261, 0
    %265 = vmatprep.subr.mxu0 0.0
    %266 = vmatpush1.msra.mxu0 %v262
    %267 = vmatprep.subr.mxu0 0.0
    %268 = vmatpush1.msra.mxu0 %v263
    %269 = vmatprep.subr.mxu0 0.0
    %270 = vmatpush1.msra.mxu0 0.0
    %271 = vmatprep.subr.mxu0 0.0
    %272 = vmatpush1.msra.mxu0 0.0
    %273 = vmatprep.subr.mxu0 0.0
    %274 = vmatpush1.msra.mxu0 0.0
    %275 = vmatprep.subr.mxu0 0.0
    %276 = vmatpush1.msra.mxu0 0.0
    %277 = vmatprep.subr.mxu0 0.0
    %278 = vmatpush1.msra.mxu0 0.0
    %279 = vmatprep.subr.mxu0 0.0
    %280 = vmatpush1.msra.mxu0 0.0
    %281 = vmatprep.subr.mxu0 0.0
    %282 = vmatpush1.msra.mxu0 0.0
    %283 = vmatprep.subr.mxu0 0.0
    %284 = vmatpush1.msra.mxu0 0.0
    %285 = vmatprep.subr.mxu0 0.0
    %286 = vmatpush1.msra.mxu0 0.0
    %287 = vmatprep.subr.mxu0 0.0
    %288 = vmatpush1.msra.mxu0 0.0
    %289 = vmatprep.subr.mxu0 0.0
    %290 = vmatpush1.msra.mxu0 0.0
    %291 = vmatprep.subr.mxu0 0.0
    %292 = vmatpush1.msra.mxu0 0.0
    %293 = vmatprep.subr.mxu0 0.0
    %294 = vmatpush1.msra.mxu0 0.0
    %295 = vmatprep.subr.mxu0 0.0
    %296 = vmatpush1.msra.mxu0 0.0
    %297 = vmatprep.subr.mxu0 0.0
    %298 = vmatpush1.msra.mxu0 0.0
    %299 = vmatprep.subr.mxu0 0.0
    %300 = vmatpush1.msra.mxu0 0.0
    %301 = vmatprep.subr.mxu0 0.0
    %302 = vmatpush1.msra.mxu0 0.0
    %303 = vmatprep.subr.mxu0 0.0
    %304 = vmatpush1.msra.mxu0 0.0
    %305 = vmatprep.subr.mxu0 0.0
    %306 = vmatpush1.msra.mxu0 0.0
    %307 = vmatprep.subr.mxu0 0.0
    %308 = vmatpush1.msra.mxu0 0.0
    %309 = vmatprep.subr.mxu0 0.0
    %310 = vmatpush1.msra.mxu0 0.0
    %311 = vmatprep.subr.mxu0 0.0
    %312 = vmatpush1.msra.mxu0 0.0
    %313 = vmatprep.subr.mxu0 0.0
    %314 = vmatpush1.msra.mxu0 0.0
    %315 = vmatprep.subr.mxu0 0.0
    %316 = vmatpush1.msra.mxu0 0.0
    %317 = vmatprep.subr.mxu0 0.0
    %318 = vmatpush1.msra.mxu0 0.0
    %319 = vmatprep.subr.mxu0 0.0
    %320 = vmatpush1.msra.mxu0 0.0
    %321 = vmatprep.subr.mxu0 0.0
    %322 = vmatpush1.msra.mxu0 0.0
    %323 = vmatprep.subr.mxu0 0.0
    %324 = vmatpush1.msra.mxu0 0.0
    %325 = vmatprep.subr.mxu0 0.0
    %326 = vmatpush1.msra.mxu0 0.0
    %327 = vmatprep.subr.mxu0 0.0
    %328 = vmatpush1.msra.mxu0 0.0
    %329 = vmatprep.mubr.f32.mxu0 0.0
    %330 = vmatmul.mubr.f32.gmra.mrb[0].mxu0 %v151
    %v331 = vpop.f32.mrb[0].mxu0
    %v332 = vadd.f32 %v147, %v331
    %v333 = vpop.f32.mrb[0].mxu0
    %334 = vdwg.mxu0
    %v335 = vmax.f32 %v332, 0.0
    %s336 = scalar_lea.vmem %s4, 8
    %337 = vst [vmem:[%s336] sm:$0xff] %v335
    %s338 = sadd.s32 %s227, 1
    %p339 = scmp.lt.s32.totalorder %s338, 2
    %s340 = scalar_select %p339, 1, 0
    %v341 = vstv %s340
    %vm342 = vcmp.eq.s32.totalorder %v341, 1
    %vm343 = vmand %vm122, %vm342
    %v344 = vsel %vm343, 1, 0
    %vm345 = vcmp.eq.s32.totalorder %v344, 1
    %v346 = vsel %vm345, %v335, 0.0
    %347 = vadd.xlane.f32.xlu0 %v346
    %v348 = vpop.xlane.xlu0 %347
    %v349 = vadd.f32 %v238, %v348
    %v350 = vmul.f32 %v346, %v346
    %351 = vadd.xlane.f32.xlu0 %v350
    %v352 = vpop.xlane.xlu0 %351
    %v353 = vadd.f32 %v242, %v352
    %vm354 = vcmask 7168
    %v355 = vsel %vm354, %v349, %v353
    %vm356 = vcmask 15360
    %357 = vst.msk [vmem:[%s5] sm:$0xff] %vm356, %v355
    // Predicated region
    $region100: #{convolution_block.2} parent=1 // pred_check
      _
    $region101: #{convolution_block.2} parent=1 // pred_check_branch
      %359 = sbr.rel (0) target = $region103
    $region102: #{convolution_block.2} parent=1 // pred_region
      _
    $region103: #{convolution_block.2} parent=1 // pred_fallthru
      _
    // Predicated region
    $region104: #{convolution_block.2} parent=1 // pred_check
      _
    $region105: #{convolution_block.2} parent=1 // pred_check_branch
      %361 = sbr.rel (0) target = $region107
    $region106: #{convolution_block.2} parent=1 // pred_region
      _
    $region107: #{convolution_block.2} parent=1 // pred_fallthru
      _
    // Predicated region
    $region108: #{convolution_block.2} parent=1 // pred_check
      _
    $region109: #{convolution_block.2} parent=1 // pred_check_branch
      %363 = sbr.rel (0) target = $region111
    $region110: #{convolution_block.2} parent=1 // pred_region
      _
    $region111: #{convolution_block.2} parent=1 // pred_fallthru
      _
    // Predicated region
    $region112: #{convolution_block.2} parent=1 // pred_check
      _
    $region113: #{convolution_block.2} parent=1 // pred_check_branch
      %365 = sbr.rel (0) target = $region115
    $region114: #{convolution_block.2} parent=1 // pred_region
      _
    $region115: #{convolution_block.2} parent=1 // pred_fallthru
      _

</llo_original>
